<compile_context>
chip_gen: v7x
topology: tpu7x:2x2x1
jax: 0.10.0
libtpu: 0.0.40
codegen_flags: <defaults>
</compile_context>

<pallas_src>
import jax
import jax.numpy as jnp
from jax.experimental import pallas as pl
from jax.experimental.pallas import tpu as pltpu


def _round_up(x, m):
    return -(-x // m) * m


def _default_tb(B, S, D, itemsize=4):
    """Pick the batch-chunk size for one grid step."""
    # VMEM footprint of one batch row of the z block: the minor dim D is
    # padded to the 128-lane vreg width inside VMEM.
    row_bytes = S * _round_up(D, 128) * itemsize
    # Keep one z buffer around ~2 MiB (double-buffered + same-order f32
    # intermediates stays far below the 16-32 MiB scoped-VMEM default).
    budget = 2 * 1024 * 1024
    tb_cap = max(8, (budget // row_bytes) // 8 * 8)
    # >= 8 rows per step (full-sublane output stores); >= 2 steps on large
    # batches so both v7x TensorCores get work via the "parallel" grid axis.
    tb = min(max(B // 2, 8), tb_cap, 1024)
    return _round_up(tb, 8)


def attention_kernel(z_ref, w1_ref, b1_ref, w2_ref, o_ref):
    # z_ref: (TB, S, D)  w1_ref: (D, H)  b1_ref: (1, H)  w2_ref: (1, H)
    # o_ref: (TB, D)
    z = z_ref[...]
    TB, S, D = z.shape

    # One tall-M MXU matmul for the whole batch chunk: (TB*S, D) @ (D, H).
    # Merging the two leading dims is a layout-free reshape.
    zf = z.reshape(TB * S, D)
    h = jnp.tanh(
        jnp.dot(zf, w1_ref[...], preferred_element_type=jnp.float32)
        + b1_ref[...]
    )                                                      # (TB*S, H) f32

    # Second projection (H -> 1) on VPU (mul) + XLU (lane reduce); avoids an
    # N=1 MXU matmul.
    s = jnp.sum(h * w2_ref[...], axis=-1, keepdims=True)   # (TB*S, 1)
    s = s.reshape(TB, S, 1)

    # Per-batch-row softmax over the sequence axis (torch dim=1).
    # NOTE: assumes the full sequence S is resident in this block (it is: the
    # S axis is never tiled).  If S is ever tiled, padded rows must be masked
    # before the max/exp/sum below.
    m = jnp.max(s, axis=1, keepdims=True)                   # (TB, 1, 1)
    e = jnp.exp(s - m)                                      # (TB, S, 1)
    denom = jnp.sum(e, axis=1, keepdims=True)               # (TB, 1, 1)
    beta = e * pl.reciprocal(denom, approx=True)            # EUP vrcp

    # Weighted sum over the sequence axis (sublane reduce on XLU).
    out = jnp.sum(beta * z.astype(jnp.float32), axis=1)     # (TB, D)
    o_ref[...] = out.astype(o_ref.dtype)


def attention_forward(z, w1, b1, w2, *, tb=None):
    """z: (B, S, D), w1: (D, H), b1: (H,), w2: (H,)  ->  (B, D)"""
    B, S, D = z.shape
    H = w1.shape[1]

    if tb is None:
        tb = _default_tb(B, S, D, jnp.dtype(z.dtype).itemsize)

    Bp = _round_up(max(B, tb), tb)
    if Bp != B:
        # Zero-padded rows produce finite values (tanh(b1) -> softmax over a
        # constant row -> weighted sum of zeros = 0) and are sliced off below.
        z = jnp.pad(z, ((0, Bp - B), (0, 0), (0, 0)))

    b1_2d = b1.reshape(1, H)
    w2_2d = w2.reshape(1, H)

    out = pl.pallas_call(
        attention_kernel,
        out_shape=jax.ShapeDtypeStruct((Bp, D), z.dtype),
        grid_spec=pltpu.PrefetchScalarGridSpec(
            num_scalar_prefetch=0,
            grid=(Bp // tb,),
            in_specs=[
                pl.BlockSpec((tb, S, D), lambda i: (i, 0, 0)),
                # Weights: constant index maps -> stay VMEM-resident.
                pl.BlockSpec((D, H), lambda i: (0, 0)),
                pl.BlockSpec((1, H), lambda i: (0, 0)),
                pl.BlockSpec((1, H), lambda i: (0, 0)),
            ],
            out_specs=pl.BlockSpec((tb, D), lambda i: (i, 0)),
        ),
        compiler_params=pltpu.CompilerParams(
            dimension_semantics=("parallel",),
        ),
    )(z, w1, b1_2d, w2_2d)
    return out[:B]


def reference_forward(z, w1, b1, w2):
    """Pure-JAX reference matching the PyTorch semantics."""
    w = jnp.tanh(z @ w1 + b1)           # (B, S, H)
    s = w @ w2.reshape(-1, 1)           # (B, S, 1)
    beta = jax.nn.softmax(s, axis=1)    # softmax over sequence
    return jnp.sum(beta * z, axis=1)    # (B, D)


def xavier_uniform(key, shape, fan_in, fan_out, dtype=jnp.float32):
    # deterministic xavier-uniform-like init (matches shapes, not torch's RNG)
    limit = jnp.sqrt(6.0 / (fan_in + fan_out)).astype(dtype)
    return jax.random.uniform(key, shape, dtype, minval=-limit, maxval=limit)


if __name__ == "__main__":
    B, S, D, H = 2, 8, 16, 32   # batch, seq, in_size, hidden_size

    key = jax.random.PRNGKey(0)
    k_z, k_w1, k_w2 = jax.random.split(key, 3)

    z = jax.random.normal(k_z, (B, S, D), dtype=jnp.float32)

    # l1: Linear(D -> H) xavier-uniform weight, zero bias
    w1 = xavier_uniform(k_w1, (D, H), fan_in=D, fan_out=H)
    b1 = jnp.zeros((H,), dtype=jnp.float32)
    # l2: Linear(H -> 1) xavier-uniform weight, no bias
    w2 = xavier_uniform(k_w2, (H,), fan_in=H, fan_out=1)

    out = attention_forward(z, w1, b1, w2)
    out = jax.block_until_ready(out)

    ref = reference_forward(z, w1, b1, w2)
    assert out.shape == (B, D)
    # Tolerance accounts for the EUP approximate reciprocal in the softmax
    # normalization (approx=True); structural bugs would be off by >> 1e-2.
    assert jnp.allclose(out, ref, atol=1e-2, rtol=1e-2), (
        f"mismatch: max abs err {jnp.max(jnp.abs(out - ref))}"
    )
    print("KERNEL_OK")
</pallas_src>

<mosaic_0001>
module attributes {stable_mosaic.version = 11 : i64} {
  func.func @attention_kernel(%arg0: i32, %arg1: memref<8x8x16xf32, #tpu.memory_space<vmem>>, %arg2: memref<16x32xf32, #tpu.memory_space<vmem>>, %arg3: memref<1x32xf32, #tpu.memory_space<vmem>>, %arg4: memref<1x32xf32, #tpu.memory_space<vmem>>, %arg5: memref<8x16xf32, #tpu.memory_space<vmem>>) attributes {dimension_semantics = [#tpu.dimension_semantics<parallel>], iteration_bounds = array<i64: 1>, scalar_prefetch = 0 : i64, scratch_operands = 0 : i64, tpu.core_type = #tpu.core_type<tc>, window_params = [{transform_indices = @transform_0, window_bounds = array<i64: 8, 8, 16>}, {pipeline_mode = #tpu.pipeline_mode<synchronous>, transform_indices = @transform_1, window_bounds = array<i64: 16, 32>}, {pipeline_mode = #tpu.pipeline_mode<synchronous>, transform_indices = @transform_2, window_bounds = array<i64: 1, 32>}, {pipeline_mode = #tpu.pipeline_mode<synchronous>, transform_indices = @transform_3, window_bounds = array<i64: 1, 32>}, {transform_indices = @transform_4, window_bounds = array<i64: 8, 16>}]} {
    %c0 = arith.constant 0 : index
    %c0_0 = arith.constant 0 : index
    %c0_1 = arith.constant 0 : index
    %0 = vector.load %arg1[%c0, %c0_0, %c0_1] : memref<8x8x16xf32, #tpu.memory_space<vmem>>, vector<8x8x16xf32>
    %1 = vector.shape_cast %0 : vector<8x8x16xf32> to vector<64x16xf32>
    %c0_2 = arith.constant 0 : index
    %c0_3 = arith.constant 0 : index
    %2 = vector.load %arg2[%c0_2, %c0_3] : memref<16x32xf32, #tpu.memory_space<vmem>>, vector<16x32xf32>
    %cst = arith.constant dense<0.000000e+00> : vector<64x32xf32>
    %3 = tpu.matmul %1, %2, %cst {dimension_numbers = #tpu.dot_dimension_numbers<[1], [0], [0], [1], [0, 0, 1, 1], [], []>} : vector<64x16xf32>, vector<16x32xf32>, vector<64x32xf32> -> vector<64x32xf32>
    %c0_4 = arith.constant 0 : index
    %c0_5 = arith.constant 0 : index
    %4 = vector.load %arg3[%c0_4, %c0_5] : memref<1x32xf32, #tpu.memory_space<vmem>>, vector<1x32xf32>
    %5 = vector.broadcast %4 : vector<1x32xf32> to vector<64x32xf32>
    %6 = arith.addf %3, %5 : vector<64x32xf32>
    %7 = math.tanh %6 : vector<64x32xf32>
    %c0_6 = arith.constant 0 : index
    %c0_7 = arith.constant 0 : index
    %8 = vector.load %arg4[%c0_6, %c0_7] : memref<1x32xf32, #tpu.memory_space<vmem>>, vector<1x32xf32>
    %9 = vector.broadcast %8 : vector<1x32xf32> to vector<64x32xf32>
    %10 = arith.mulf %7, %9 : vector<64x32xf32>
    %cst_8 = arith.constant dense<0.000000e+00> : vector<64xf32>
    %11 = vector.multi_reduction <add>, %10, %cst_8 [1] : vector<64x32xf32> to vector<64xf32>
    %12 = vector.shape_cast %11 : vector<64xf32> to vector<64x1xf32>
    %13 = vector.shape_cast %12 : vector<64x1xf32> to vector<8x8x1xf32>
    %cst_9 = arith.constant dense<0xFF800000> : vector<8x1xf32>
    %14 = vector.multi_reduction <maximumf>, %13, %cst_9 [1] : vector<8x8x1xf32> to vector<8x1xf32>
    %15 = vector.shape_cast %14 : vector<8x1xf32> to vector<8x1x1xf32>
    %16 = vector.broadcast %15 : vector<8x1x1xf32> to vector<8x8x1xf32>
    %17 = arith.subf %13, %16 : vector<8x8x1xf32>
    %18 = math.exp %17 : vector<8x8x1xf32>
    %cst_10 = arith.constant dense<0.000000e+00> : vector<8x1xf32>
    %19 = vector.multi_reduction <add>, %18, %cst_10 [1] : vector<8x8x1xf32> to vector<8x1xf32>
    %20 = vector.shape_cast %19 : vector<8x1xf32> to vector<8x1x1xf32>
    %21 = tpu.reciprocal %20 {approx = true} : vector<8x1x1xf32> -> vector<8x1x1xf32>
    %22 = vector.broadcast %21 : vector<8x1x1xf32> to vector<8x8x1xf32>
    %23 = arith.mulf %18, %22 : vector<8x8x1xf32>
    %24 = vector.broadcast %23 : vector<8x8x1xf32> to vector<8x8x16xf32>
    %25 = arith.mulf %24, %0 : vector<8x8x16xf32>
    %cst_11 = arith.constant dense<0.000000e+00> : vector<8x16xf32>
    %26 = vector.multi_reduction <add>, %25, %cst_11 [1] : vector<8x8x16xf32> to vector<8x16xf32>
    %c0_12 = arith.constant 0 : index
    %c0_13 = arith.constant 0 : index
    %27 = vector.load %arg5[%c0_12, %c0_13] : memref<8x16xf32, #tpu.memory_space<vmem>>, vector<8x16xf32>
    tpu.vector_store %arg5[%c0_12, %c0_13], %26 {strides = array<i32>} : memref<8x16xf32, #tpu.memory_space<vmem>>, vector<8x16xf32>,
    return
  }
  func.func @transform_0(%arg0: i32) -> (i32, i32, i32) {
    %c0_i32 = arith.constant 0 : i32
    %c0_i32_0 = arith.constant 0 : i32
    %c0_i32_1 = arith.constant 0 : i32
    return %arg0, %c0_i32, %c0_i32_0 : i32, i32, i32
  }
  func.func @transform_1(%arg0: i32) -> (i32, i32) {
    %c0_i32 = arith.constant 0 : i32
    %c0_i32_0 = arith.constant 0 : i32
    %c0_i32_1 = arith.constant 0 : i32
    return %c0_i32, %c0_i32_0 : i32, i32
  }
  func.func @transform_2(%arg0: i32) -> (i32, i32) {
    %c0_i32 = arith.constant 0 : i32
    %c0_i32_0 = arith.constant 0 : i32
    %c0_i32_1 = arith.constant 0 : i32
    return %c0_i32, %c0_i32_0 : i32, i32
  }
  func.func @transform_3(%arg0: i32) -> (i32, i32) {
    %c0_i32 = arith.constant 0 : i32
    %c0_i32_0 = arith.constant 0 : i32
    %c0_i32_1 = arith.constant 0 : i32
    return %c0_i32, %c0_i32_0 : i32, i32
  }
  func.func @transform_4(%arg0: i32) -> (i32, i32) {
    %c0_i32 = arith.constant 0 : i32
    %c0_i32_0 = arith.constant 0 : i32
    return %arg0, %c0_i32 : i32, i32
  }
}

</mosaic_0001>

<llo_original>
// kernel: tpu_custom_call.1
$region0: #{tpu_custom_call.1}
  #allocation0 [shape = 'u32[]', space=smem, size = 0x4, offset = 0x4, fixed_abs, tag = 'smem constant byte address 0x4 - core index']
  #allocation1 [shape = 'u32[144,128]{1,0:T(1,128)}', space=vmem, size = 0x12000, scoped, tag = 'internal scratch']
  %s0 = inlined_call_operand.hbm [shape: f32[8,8,16], index: 0, kind: input, shape index: {}]
  %s1 = inlined_call_operand.hbm [shape: f32[16,32], index: 1, kind: input, shape index: {}]
  %s2 = inlined_call_operand.vmem [shape: f32[1,32], index: 2, kind: input, shape index: {}]
  %s3 = inlined_call_operand.vmem [shape: f32[1,32], index: 3, kind: input, shape index: {}]
  %s4 = inlined_call_operand.hbm [shape: f32[8,16], index: 4, kind: output, shape index: {}]
  %s5 = sld [smem:[#allocation0]]
  $region34: #{tpu_custom_call.1} parent=0
    _
  %s7 = ssub.s32 1, %s5
  %s8 = scalar_select 0, %s7, %s5
  $region1: #{tpu_custom_call.1} parent=0
    #allocation2 [shape = 'u8[32768]{0}', space=vmem, size = 0x8000, scoped, tag = 'input window, operand 0, single buffered']
    #allocation3 [shape = 's32[1]{0}', space=sflag, size = 0x4, scoped, tag = 'scoped memory for tpu_custom_call.1']
    #allocation4 [shape = 's32[1]{0}', space=sflag, size = 0x4, scoped, tag = 'scoped memory for tpu_custom_call.1']
    #allocation5 [shape = 'u8[8192]{0}', space=vmem, size = 0x2000, scoped, tag = 'input window, operand 1, single buffered']
    #allocation6 [shape = 's32[1]{0}', space=sflag, size = 0x4, scoped, tag = 'scoped memory for tpu_custom_call.1']
    #allocation7 [shape = 'u8[4096]{0}', space=vmem, size = 0x1000, scoped, tag = 'output window, operand 0, single buffered']
    %9 = vsyncpa [#allocation3], 0
    %10 = vsyncpa [#allocation6], 0
    %11 = vsyncpa [#allocation4], 0
    // Predicated region
    $region2: #{tpu_custom_call.1} parent=1 // pred_check
      _
    $region3: #{tpu_custom_call.1} parent=1 // pred_check_branch
      %13 = sbr.rel (0) target = $region5
    $region4: #{tpu_custom_call.1} parent=1 // pred_region
      %s15 = ssub.s32 1024, 1024
      %16 = vsyncadd [#allocation3], %s15
      %s17 = sshll.u32 [#allocation2], 4
      %s18 = int_to_ptr.vmem [resolvable:$true] %s17
      %23 = dma.hbm_to_vmem [thread:$0]  %s0, 1024, %s18, [#allocation3], 128, 128, 8
    $region5: #{tpu_custom_call.1} parent=1 // pred_fallthru
      _
    // Predicated region
    $region6: #{tpu_custom_call.1} parent=1 // pred_check
      _
    $region7: #{tpu_custom_call.1} parent=1 // pred_check_branch
      %25 = sbr.rel (0) target = $region9
    $region8: #{tpu_custom_call.1} parent=1 // pred_region
      %s27 = ssub.s32 256, 256
      %28 = vsyncadd [#allocation6], %s27
      %s29 = sshll.u32 [#allocation5], 4
      %s30 = int_to_ptr.vmem [resolvable:$true] %s29
      %35 = dma.hbm_to_vmem [thread:$0]  %s1, 256, %s30, [#allocation6], 128, 128, 8
    $region9: #{tpu_custom_call.1} parent=1 // pred_fallthru
      _
    // Predicated region
    $region10: #{tpu_custom_call.1} parent=1 // pred_check
      _
    $region11: #{tpu_custom_call.1} parent=1 // pred_check_branch
      %37 = sbr.rel (0) target = $region13
    $region12: #{tpu_custom_call.1} parent=1 // pred_region
      _
    $region13: #{tpu_custom_call.1} parent=1 // pred_fallthru
      _
    // Predicated region
    $region14: #{tpu_custom_call.1} parent=1 // pred_check
      _
    $region15: #{tpu_custom_call.1} parent=1 // pred_check_branch
      %39 = sbr.rel (0) target = $region17
    $region16: #{tpu_custom_call.1} parent=1 // pred_region
      _
    $region17: #{tpu_custom_call.1} parent=1 // pred_fallthru
      _
    // Predicated region
    $region18: #{tpu_custom_call.1} parent=1 // pred_check
      _
    $region19: #{tpu_custom_call.1} parent=1 // pred_check_branch
      %41 = sbr.rel (0) target = $region21
    $region20: #{tpu_custom_call.1} parent=1 // pred_region
      %42 = dma.done [#allocation3], 1024
    $region21: #{tpu_custom_call.1} parent=1 // pred_fallthru
      _
    // Predicated region
    $region22: #{tpu_custom_call.1} parent=1 // pred_check
      _
    $region23: #{tpu_custom_call.1} parent=1 // pred_check_branch
      %44 = sbr.rel (0) target = $region25
    $region24: #{tpu_custom_call.1} parent=1 // pred_region
      %45 = dma.done [#allocation6], 256
    $region25: #{tpu_custom_call.1} parent=1 // pred_fallthru
      _
    %v46 = vld [vmem:[#allocation2] sm:$0xff]
    %v47 = vld [vmem:[#allocation2 + $0x8] sm:$0xff]
    %v48 = vld [vmem:[#allocation2 + $0x10] sm:$0xff]
    %v49 = vld [vmem:[#allocation2 + $0x18] sm:$0xff]
    %v50 = vld [vmem:[#allocation2 + $0x20] sm:$0xff]
    %v51 = vld [vmem:[#allocation2 + $0x28] sm:$0xff]
    %v52 = vld [vmem:[#allocation2 + $0x30] sm:$0xff]
    %v53 = vld [vmem:[#allocation2 + $0x38] sm:$0xff]
    %v54 = vld [vmem:[#allocation5] sm:$0xff]
    %v55 = vld [vmem:[#allocation5 + $0x8] sm:$0xff]
    %v56 = vld [vmem:[%s2] sm:$0x1]
    %v58 = vlaneseq
    %v59 = vshrl.u32 %v58, 7
    %v60 = vsub.s32 0, %v59
    %v61 = vrot.slane %v56, %v60
    %vm63 = vcmask 130048
    %v65 = vsel %vm63, %v46, 0
    %v68 = vsel %vm63, %v47, 0
    %v71 = vsel %vm63, %v48, 0
    %v74 = vsel %vm63, %v49, 0
    %v77 = vsel %vm63, %v50, 0
    %v80 = vsel %vm63, %v51, 0
    %v83 = vsel %vm63, %v52, 0
    %v86 = vsel %vm63, %v53, 0
    %88 = vmatprep.subr.mxu0 0.0
    %89 = vmatpush1.msra.mxu0 %v54
    %90 = vmatprep.subr.mxu0 0.0
    %91 = vmatpush1.msra.mxu0 %v55
    %92 = vmatprep.subr.mxu0 0.0
    %93 = vmatpush1.msra.mxu0 0.0
    %94 = vmatprep.subr.mxu0 0.0
    %95 = vmatpush1.msra.mxu0 0.0
    %96 = vmatprep.subr.mxu0 0.0
    %97 = vmatpush1.msra.mxu0 0.0
    %98 = vmatprep.subr.mxu0 0.0
    %99 = vmatpush1.msra.mxu0 0.0
    %100 = vmatprep.subr.mxu0 0.0
    %101 = vmatpush1.msra.mxu0 0.0
    %102 = vmatprep.subr.mxu0 0.0
    %103 = vmatpush1.msra.mxu0 0.0
    %104 = vmatprep.subr.mxu0 0.0
    %105 = vmatpush1.msra.mxu0 0.0
    %106 = vmatprep.subr.mxu0 0.0
    %107 = vmatpush1.msra.mxu0 0.0
    %108 = vmatprep.subr.mxu0 0.0
    %109 = vmatpush1.msra.mxu0 0.0
    %110 = vmatprep.subr.mxu0 0.0
    %111 = vmatpush1.msra.mxu0 0.0
    %112 = vmatprep.subr.mxu0 0.0
    %113 = vmatpush1.msra.mxu0 0.0
    %114 = vmatprep.subr.mxu0 0.0
    %115 = vmatpush1.msra.mxu0 0.0
    %116 = vmatprep.subr.mxu0 0.0
    %117 = vmatpush1.msra.mxu0 0.0
    %118 = vmatprep.subr.mxu0 0.0
    %119 = vmatpush1.msra.mxu0 0.0
    %120 = vmatprep.subr.mxu0 0.0
    %121 = vmatpush1.msra.mxu0 0.0
    %122 = vmatprep.subr.mxu0 0.0
    %123 = vmatpush1.msra.mxu0 0.0
    %124 = vmatprep.subr.mxu0 0.0
    %125 = vmatpush1.msra.mxu0 0.0
    %126 = vmatprep.subr.mxu0 0.0
    %127 = vmatpush1.msra.mxu0 0.0
    %128 = vmatprep.subr.mxu0 0.0
    %129 = vmatpush1.msra.mxu0 0.0
    %130 = vmatprep.subr.mxu0 0.0
    %131 = vmatpush1.msra.mxu0 0.0
    %132 = vmatprep.subr.mxu0 0.0
    %133 = vmatpush1.msra.mxu0 0.0
    %134 = vmatprep.subr.mxu0 0.0
    %135 = vmatpush1.msra.mxu0 0.0
    %136 = vmatprep.subr.mxu0 0.0
    %137 = vmatpush1.msra.mxu0 0.0
    %138 = vmatprep.subr.mxu0 0.0
    %139 = vmatpush1.msra.mxu0 0.0
    %140 = vmatprep.subr.mxu0 0.0
    %141 = vmatpush1.msra.mxu0 0.0
    %142 = vmatprep.subr.mxu0 0.0
    %143 = vmatpush1.msra.mxu0 0.0
    %144 = vmatprep.subr.mxu0 0.0
    %145 = vmatpush1.msra.mxu0 0.0
    %146 = vmatprep.subr.mxu0 0.0
    %147 = vmatpush1.msra.mxu0 0.0
    %148 = vmatprep.subr.mxu0 0.0
    %149 = vmatpush1.msra.mxu0 0.0
    %150 = vmatprep.subr.mxu0 0.0
    %151 = vmatpush1.msra.mxu0 0.0
    %152 = vmatprep.mubr.f32.mxu0 0.0
    %153 = vmatmul.mubr.f32.gmra.mrb[0].mxu0 %v65
    %v154 = vpop.f32.mrb[0].mxu0
    %v155 = vadd.f32 %v61, %v154
    %v156 = vpop.f32.mrb[0].mxu0
    %157 = vmatprep.mubr.f32.mxu0 0.0
    %158 = vmatmul.mubr.f32.gmra.mrb[0].mxu0 %v68
    %v159 = vpop.f32.mrb[0].mxu0
    %v160 = vadd.f32 %v61, %v159
    %v161 = vpop.f32.mrb[0].mxu0
    %162 = vmatprep.mubr.f32.mxu0 0.0
    %163 = vmatmul.mubr.f32.gmra.mrb[0].mxu0 %v71
    %v164 = vpop.f32.mrb[0].mxu0
    %v165 = vadd.f32 %v61, %v164
    %v166 = vpop.f32.mrb[0].mxu0
    %167 = vmatprep.mubr.f32.mxu0 0.0
    %168 = vmatmul.mubr.f32.gmra.mrb[0].mxu0 %v74
    %v169 = vpop.f32.mrb[0].mxu0
    %v170 = vadd.f32 %v61, %v169
    %v171 = vpop.f32.mrb[0].mxu0
    %172 = vmatprep.mubr.f32.mxu0 0.0
    %173 = vmatmul.mubr.f32.gmra.mrb[0].mxu0 %v77
    %v174 = vpop.f32.mrb[0].mxu0
    %v175 = vadd.f32 %v61, %v174
    %v176 = vpop.f32.mrb[0].mxu0
    %177 = vmatprep.mubr.f32.mxu0 0.0
    %178 = vmatmul.mubr.f32.gmra.mrb[0].mxu0 %v80
    %v179 = vpop.f32.mrb[0].mxu0
    %v180 = vadd.f32 %v61, %v179
    %v181 = vpop.f32.mrb[0].mxu0
    %182 = vmatprep.mubr.f32.mxu0 0.0
    %183 = vmatmul.mubr.f32.gmra.mrb[0].mxu0 %v83
    %v184 = vpop.f32.mrb[0].mxu0
    %v185 = vadd.f32 %v61, %v184
    %v186 = vpop.f32.mrb[0].mxu0
    %187 = vmatprep.mubr.f32.mxu0 0.0
    %188 = vmatmul.mubr.f32.gmra.mrb[0].mxu0 %v86
    %v189 = vpop.f32.mrb[0].mxu0
    %v190 = vadd.f32 %v61, %v189
    %v191 = vpop.f32.mrb[0].mxu0
    %192 = vdwg.mxu0
    %v193 = vtanh.pop %v155
    %v194 = vtanh.pop %v160
    %v195 = vtanh.pop %v165
    %v196 = vtanh.pop %v170
    %v197 = vtanh.pop %v175
    %v198 = vtanh.pop %v180
    %v199 = vtanh.pop %v185
    %v200 = vtanh.pop %v190
    %v201 = vld [vmem:[%s3] sm:$0x1]
    %v203 = vlaneseq
    %v204 = vshrl.u32 %v203, 7
    %v205 = vsub.s32 0, %v204
    %v206 = vrot.slane %v201, %v205
    %v208 = vmul.f32 %v193, %v206
    %v209 = vmul.f32 %v194, %v206
    %v210 = vmul.f32 %v195, %v206
    %v211 = vmul.f32 %v196, %v206
    %v212 = vmul.f32 %v197, %v206
    %v213 = vmul.f32 %v198, %v206
    %v214 = vmul.f32 %v199, %v206
    %v215 = vmul.f32 %v200, %v206
    %vm216 = vcmask 261120
    %v217 = vsel %vm216, %v208, 0.0
    %218 = vadd.xlane.f32.xlu0 %v217
    %v219 = vpop.xlane.xlu0 %218
    %v220 = vsel %vm216, %v209, 0.0
    %221 = vadd.xlane.f32.xlu0 %v220
    %v222 = vpop.xlane.xlu0 %221
    %v223 = vsel %vm216, %v210, 0.0
    %224 = vadd.xlane.f32.xlu0 %v223
    %v225 = vpop.xlane.xlu0 %224
    %v226 = vsel %vm216, %v211, 0.0
    %227 = vadd.xlane.f32.xlu0 %v226
    %v228 = vpop.xlane.xlu0 %227
    %v229 = vsel %vm216, %v212, 0.0
    %230 = vadd.xlane.f32.xlu0 %v229
    %v231 = vpop.xlane.xlu0 %230
    %v232 = vsel %vm216, %v213, 0.0
    %233 = vadd.xlane.f32.xlu0 %v232
    %v234 = vpop.xlane.xlu0 %233
    %v235 = vsel %vm216, %v214, 0.0
    %236 = vadd.xlane.f32.xlu0 %v235
    %v237 = vpop.xlane.xlu0 %236
    %v238 = vsel %vm216, %v215, 0.0
    %239 = vadd.xlane.f32.xlu0 %v238
    %v240 = vpop.xlane.xlu0 %239
    %v241 = vrot.slane %v219, 4
    %v242 = vmax.f32 %v219, %v241
    %v243 = vrot.slane %v242, 2
    %v244 = vmax.f32 %v242, %v243
    %v245 = vrot.slane %v244, 1
    %v246 = vmax.f32 %v244, %v245
    %v247 = vrot.slane %v222, 4
    %v248 = vmax.f32 %v222, %v247
    %v249 = vrot.slane %v248, 2
    %v250 = vmax.f32 %v248, %v249
    %v251 = vrot.slane %v250, 1
    %v252 = vmax.f32 %v250, %v251
    %v253 = vrot.slane %v225, 4
    %v254 = vmax.f32 %v225, %v253
    %v255 = vrot.slane %v254, 2
    %v256 = vmax.f32 %v254, %v255
    %v257 = vrot.slane %v256, 1
    %v258 = vmax.f32 %v256, %v257
    %v259 = vrot.slane %v228, 4
    %v260 = vmax.f32 %v228, %v259
    %v261 = vrot.slane %v260, 2
    %v262 = vmax.f32 %v260, %v261
    %v263 = vrot.slane %v262, 1
    %v264 = vmax.f32 %v262, %v263
    %v265 = vrot.slane %v231, 4
    %v266 = vmax.f32 %v231, %v265
    %v267 = vrot.slane %v266, 2
    %v268 = vmax.f32 %v266, %v267
    %v269 = vrot.slane %v268, 1
    %v270 = vmax.f32 %v268, %v269
    %v271 = vrot.slane %v234, 4
    %v272 = vmax.f32 %v234, %v271
    %v273 = vrot.slane %v272, 2
    %v274 = vmax.f32 %v272, %v273
    %v275 = vrot.slane %v274, 1
    %v276 = vmax.f32 %v274, %v275
    %v277 = vrot.slane %v237, 4
    %v278 = vmax.f32 %v237, %v277
    %v279 = vrot.slane %v278, 2
    %v280 = vmax.f32 %v278, %v279
    %v281 = vrot.slane %v280, 1
    %v282 = vmax.f32 %v280, %v281
    %v283 = vrot.slane %v240, 4
    %v284 = vmax.f32 %v240, %v283
    %v285 = vrot.slane %v284, 2
    %v286 = vmax.f32 %v284, %v285
    %v287 = vrot.slane %v286, 1
    %v288 = vmax.f32 %v286, %v287
    %v289 = vsub.f32 %v219, %v246
    %v290 = vsub.f32 %v222, %v252
    %v291 = vsub.f32 %v225, %v258
    %v292 = vsub.f32 %v228, %v264
    %v293 = vsub.f32 %v231, %v270
    %v294 = vsub.f32 %v234, %v276
    %v295 = vsub.f32 %v237, %v282
    %v296 = vsub.f32 %v240, %v288
    %v297 = vmul.f32 %v289, 1.442695
    %v298 = vpow.pop %v297
    %v299 = vmul.f32 %v290, 1.442695
    %v300 = vpow.pop %v299
    %v301 = vmul.f32 %v291, 1.442695
    %v302 = vpow.pop %v301
    %v303 = vmul.f32 %v292, 1.442695
    %v304 = vpow.pop %v303
    %v305 = vmul.f32 %v293, 1.442695
    %v306 = vpow.pop %v305
    %v307 = vmul.f32 %v294, 1.442695
    %v308 = vpow.pop %v307
    %v309 = vmul.f32 %v295, 1.442695
    %v310 = vpow.pop %v309
    %v311 = vmul.f32 %v296, 1.442695
    %v312 = vpow.pop %v311
    %v313 = vrot.slane %v298, 4
    %v314 = vadd.f32 %v298, %v313
    %v315 = vrot.slane %v314, 2
    %v316 = vadd.f32 %v314, %v315
    %v317 = vrot.slane %v316, 1
    %v318 = vadd.f32 %v316, %v317
    %v319 = vrot.slane %v300, 4
    %v320 = vadd.f32 %v300, %v319
    %v321 = vrot.slane %v320, 2
    %v322 = vadd.f32 %v320, %v321
    %v323 = vrot.slane %v322, 1
    %v324 = vadd.f32 %v322, %v323
    %v325 = vrot.slane %v302, 4
    %v326 = vadd.f32 %v302, %v325
    %v327 = vrot.slane %v326, 2
    %v328 = vadd.f32 %v326, %v327
    %v329 = vrot.slane %v328, 1
    %v330 = vadd.f32 %v328, %v329
    %v331 = vrot.slane %v304, 4
    %v332 = vadd.f32 %v304, %v331
    %v333 = vrot.slane %v332, 2
    %v334 = vadd.f32 %v332, %v333
    %v335 = vrot.slane %v334, 1
    %v336 = vadd.f32 %v334, %v335
    %v337 = vrot.slane %v306, 4
    %v338 = vadd.f32 %v306, %v337
    %v339 = vrot.slane %v338, 2
    %v340 = vadd.f32 %v338, %v339
    %v341 = vrot.slane %v340, 1
    %v342 = vadd.f32 %v340, %v341
    %v343 = vrot.slane %v308, 4
    %v344 = vadd.f32 %v308, %v343
    %v345 = vrot.slane %v344, 2
    %v346 = vadd.f32 %v344, %v345
    %v347 = vrot.slane %v346, 1
    %v348 = vadd.f32 %v346, %v347
    %v349 = vrot.slane %v310, 4
    %v350 = vadd.f32 %v310, %v349
    %v351 = vrot.slane %v350, 2
    %v352 = vadd.f32 %v350, %v351
    %v353 = vrot.slane %v352, 1
    %v354 = vadd.f32 %v352, %v353
    %v355 = vrot.slane %v312, 4
    %v356 = vadd.f32 %v312, %v355
    %v357 = vrot.slane %v356, 2
    %v358 = vadd.f32 %v356, %v357
    %v359 = vrot.slane %v358, 1
    %v360 = vadd.f32 %v358, %v359
    %v361 = vrcp.pop %v318
    %v362 = vrcp.pop %v324
    %v363 = vrcp.pop %v330
    %v364 = vrcp.pop %v336
    %v365 = vrcp.pop %v342
    %v366 = vrcp.pop %v348
    %v367 = vrcp.pop %v354
    %v368 = vrcp.pop %v360
    %v369 = vmul.f32 %v298, %v361
    %v370 = vmul.f32 %v300, %v362
    %v371 = vmul.f32 %v302, %v363
    %v372 = vmul.f32 %v304, %v364
    %v373 = vmul.f32 %v306, %v365
    %v374 = vmul.f32 %v308, %v366
    %v375 = vmul.f32 %v310, %v367
    %v376 = vmul.f32 %v312, %v368
    %v377 = vmul.f32 %v369, %v46
    %v378 = vmul.f32 %v370, %v47
    %v379 = vmul.f32 %v371, %v48
    %v380 = vmul.f32 %v372, %v49
    %v381 = vmul.f32 %v373, %v50
    %v382 = vmul.f32 %v374, %v51
    %v383 = vmul.f32 %v375, %v52
    %v384 = vmul.f32 %v376, %v53
    %v385 = vsel %vm63, %v377, 0.0
    %v386 = vrot.slane %v385, 4
    %v387 = vadd.f32 %v385, %v386
    %v388 = vrot.slane %v387, 2
    %v389 = vadd.f32 %v387, %v388
    %v390 = vrot.slane %v389, 1
    %v391 = vadd.f32 %v389, %v390
    %v392 = vsel %vm63, %v378, 0.0
    %v393 = vrot.slane %v392, 4
    %v394 = vadd.f32 %v392, %v393
    %v395 = vrot.slane %v394, 2
    %v396 = vadd.f32 %v394, %v395
    %v397 = vrot.slane %v396, 1
    %v398 = vadd.f32 %v396, %v397
    %v399 = vsel %vm63, %v379, 0.0
    %v400 = vrot.slane %v399, 4
    %v401 = vadd.f32 %v399, %v400
    %v402 = vrot.slane %v401, 2
    %v403 = vadd.f32 %v401, %v402
    %v404 = vrot.slane %v403, 1
    %v405 = vadd.f32 %v403, %v404
    %v406 = vsel %vm63, %v380, 0.0
    %v407 = vrot.slane %v406, 4
    %v408 = vadd.f32 %v406, %v407
    %v409 = vrot.slane %v408, 2
    %v410 = vadd.f32 %v408, %v409
    %v411 = vrot.slane %v410, 1
    %v412 = vadd.f32 %v410, %v411
    %v413 = vsel %vm63, %v381, 0.0
    %v414 = vrot.slane %v413, 4
    %v415 = vadd.f32 %v413, %v414
    %v416 = vrot.slane %v415, 2
    %v417 = vadd.f32 %v415, %v416
    %v418 = vrot.slane %v417, 1
    %v419 = vadd.f32 %v417, %v418
    %v420 = vsel %vm63, %v382, 0.0
    %v421 = vrot.slane %v420, 4
    %v422 = vadd.f32 %v420, %v421
    %v423 = vrot.slane %v422, 2
    %v424 = vadd.f32 %v422, %v423
    %v425 = vrot.slane %v424, 1
    %v426 = vadd.f32 %v424, %v425
    %v427 = vsel %vm63, %v383, 0.0
    %v428 = vrot.slane %v427, 4
    %v429 = vadd.f32 %v427, %v428
    %v430 = vrot.slane %v429, 2
    %v431 = vadd.f32 %v429, %v430
    %v432 = vrot.slane %v431, 1
    %v433 = vadd.f32 %v431, %v432
    %v434 = vsel %vm63, %v384, 0.0
    %v435 = vrot.slane %v434, 4
    %v436 = vadd.f32 %v434, %v435
    %v437 = vrot.slane %v436, 2
    %v438 = vadd.f32 %v436, %v437
    %v439 = vrot.slane %v438, 1
    %v440 = vadd.f32 %v438, %v439
    %vm449 = vcmask 1041409
    %v450 = vsel %vm449, %v398, %v391
    %vm451 = vcmask 1042434
    %v452 = vsel %vm451, %v405, %v450
    %vm453 = vcmask 1043459
    %v454 = vsel %vm453, %v412, %v452
    %vm455 = vcmask 1044484
    %v456 = vsel %vm455, %v419, %v454
    %vm457 = vcmask 1045509
    %v458 = vsel %vm457, %v426, %v456
    %vm459 = vcmask 1046534
    %v460 = vsel %vm459, %v433, %v458
    %vm461 = vcmask 1047559
    %v462 = vsel %vm461, %v440, %v460
    %464 = vst.msk [vmem:[#allocation7] sm:$0xff] %vm63, %v462
    // Predicated region
    $region26: #{tpu_custom_call.1} parent=1 // pred_check
      _
    $region27: #{tpu_custom_call.1} parent=1 // pred_check_branch
      %466 = sbr.rel (0) target = $region29
    $region28: #{tpu_custom_call.1} parent=1 // pred_region
      %s468 = ssub.s32 128, 128
      %469 = vsyncadd [#allocation4], %s468
      %s471 = sshll.u32 [#allocation7], 4
      %s472 = int_to_ptr.vmem [resolvable:$true] %s471
      %474 = dma.vmem_to_hbm [thread:$0]  %s472, 128, %s4, [#allocation4]
    $region29: #{tpu_custom_call.1} parent=1 // pred_fallthru
      _
    // Predicated region
    $region30: #{tpu_custom_call.1} parent=1 // pred_check
      _
    $region31: #{tpu_custom_call.1} parent=1 // pred_check_branch
      %476 = sbr.rel (0) target = $region33
    $region32: #{tpu_custom_call.1} parent=1 // pred_region
      %477 = dma.done [#allocation4], 128
    $region33: #{tpu_custom_call.1} parent=1 // pred_fallthru
      _
    %478 = vsyncpa [#allocation3], 1
    %479 = vsyncpa [#allocation6], 1
    %480 = vsyncpa [#allocation4], 1

</llo_original>
